<compile_context>
chip_gen: v7x
topology: tpu7x:2x2x1
jax: 0.10.0
libtpu: 0.0.40
codegen_flags: <defaults>
</compile_context>

<pallas_src>
import functools
import math

import jax
import jax.numpy as jnp
import numpy as np
from jax.experimental import pallas as pl
from jax.experimental.pallas import tpu as pltpu

D_MODEL = 50
MAX_SEQ_LEN = 80


def make_pe_table(d_model: int, max_seq_len: int) -> np.ndarray:
    """Reproduce the torch buffer `pe` exactly (shape (max_seq_len, d_model))."""
    assert d_model % 2 == 0, "PositionalEncoder requires an even d_model"
    pe = np.zeros((max_seq_len, d_model), dtype=np.float32)
    for pos in range(max_seq_len):
        for i in range(0, d_model, 2):
            denom = 10000 ** (i / d_model)  # matches the PyTorch source exactly
            pe[pos, i] = math.sin(pos / denom)
            pe[pos, i + 1] = math.cos(pos / denom)
    return pe


def _pos_enc_kernel(x_ref, pe_ref, o_ref, *, scale: float):
    # x_ref / o_ref: (Bt, S, D) block; pe_ref: (S, D), block index constant
    # across the whole grid (tiny, effectively resident).
    pe = jnp.broadcast_to(pe_ref[...][None, :, :], x_ref.shape)
    o_ref[...] = x_ref[...] * scale + pe


def _choose_batch_tile(b: int, s: int, d: int, itemsize: int,
                       target_bytes: int) -> int:
    """Pick batches-per-block: ~target_bytes of x per step, >=2 steps if b>=2,
    and a divisor of b so every block is full (no padded partial tiles)."""
    per_batch = s * d * itemsize
    bt = max(1, min(b, target_bytes // max(per_batch, 1)))
    if b >= 2:
        bt = min(bt, (b + 1) // 2)  # keep >= 2 grid steps (v7x dual-TC)
    while b % bt != 0:
        bt -= 1
    return int(bt)


def positional_encoder(x: jax.Array, pe_table: jax.Array,
                       *, target_block_bytes: int = 2 << 20) -> jax.Array:
    """x: (B, S, D) float32. Returns x * sqrt(D) + pe[:S]."""
    b, s, d = x.shape
    pe_slice = pe_table[:s, :].astype(x.dtype)  # static slice, plain JAX glue
    scale = math.sqrt(d)

    bt = _choose_batch_tile(b, s, d, x.dtype.itemsize, target_block_bytes)
    grid = (pl.cdiv(b, bt),)

    block_bytes = bt * s * d * x.dtype.itemsize
    pe_bytes = s * d * x.dtype.itemsize
    # 2 double-buffered copies of the x block + 2 of the out block + pe + slack.
    vmem_budget = 4 * block_bytes + 2 * pe_bytes + (1 << 20)
    vmem_budget = int(min(max(vmem_budget, 4 << 20), 64 << 20))

    kernel = functools.partial(_pos_enc_kernel, scale=scale)

    return pl.pallas_call(
        kernel,
        out_shape=jax.ShapeDtypeStruct((b, s, d), x.dtype),
        grid_spec=pltpu.PrefetchScalarGridSpec(
            num_scalar_prefetch=0,
            grid=grid,
            in_specs=[
                pl.BlockSpec((bt, s, d), lambda i: (i, 0, 0)),
                pl.BlockSpec((s, d), lambda i: (0, 0)),
            ],
            out_specs=pl.BlockSpec((bt, s, d), lambda i: (i, 0, 0)),
        ),
        compiler_params=pltpu.CompilerParams(
            dimension_semantics=("parallel",),
            vmem_limit_bytes=vmem_budget,
        ),
    )(x, pe_slice)


if __name__ == "__main__":
    pe_table = jnp.asarray(make_pe_table(D_MODEL, MAX_SEQ_LEN))

    key = jax.random.PRNGKey(0)
    k1, k2 = jax.random.split(key)

    # Small shape consistent with the module (batch=2, seq=8, d_model=50).
    b1, s1 = 2, 8
    x1 = jax.random.normal(k1, (b1, s1, D_MODEL), dtype=jnp.float32)
    out1 = jax.block_until_ready(positional_encoder(x1, pe_table))
    ref1 = x1 * math.sqrt(D_MODEL) + pe_table[None, :s1, :]
    np.testing.assert_allclose(np.asarray(out1), np.asarray(ref1),
                               rtol=1e-6, atol=1e-6)

    # Slightly larger shape to exercise the multi-batch tiling / grid path.
    b2, s2 = 16, MAX_SEQ_LEN
    x2 = jax.random.normal(k2, (b2, s2, D_MODEL), dtype=jnp.float32)
    out2 = jax.block_until_ready(positional_encoder(x2, pe_table))
    ref2 = x2 * math.sqrt(D_MODEL) + pe_table[None, :s2, :]
    np.testing.assert_allclose(np.asarray(out2), np.asarray(ref2),
                               rtol=1e-6, atol=1e-6)

    print("KERNEL_OK")
</pallas_src>

<mosaic_0001>
module attributes {stable_mosaic.version = 11 : i64} {
  func.func @_pos_enc_kernel(%arg0: i32, %arg1: memref<1x8x50xf32, #tpu.memory_space<vmem>>, %arg2: memref<8x50xf32, #tpu.memory_space<vmem>>, %arg3: memref<1x8x50xf32, #tpu.memory_space<vmem>>) attributes {dimension_semantics = [#tpu.dimension_semantics<parallel>], iteration_bounds = array<i64: 2>, scalar_prefetch = 0 : i64, scratch_operands = 0 : i64, tpu.core_type = #tpu.core_type<tc>, window_params = [{transform_indices = @transform_0, window_bounds = array<i64: 1, 8, 50>}, {pipeline_mode = #tpu.pipeline_mode<synchronous>, transform_indices = @transform_1, window_bounds = array<i64: 8, 50>}, {transform_indices = @transform_2, window_bounds = array<i64: 1, 8, 50>}]} {
    %c0 = arith.constant 0 : index
    %c0_0 = arith.constant 0 : index
    %0 = vector.load %arg2[%c0, %c0_0] : memref<8x50xf32, #tpu.memory_space<vmem>>, vector<8x50xf32>
    %1 = vector.shape_cast %0 : vector<8x50xf32> to vector<1x8x50xf32>
    %c0_1 = arith.constant 0 : index
    %c0_2 = arith.constant 0 : index
    %c0_3 = arith.constant 0 : index
    %2 = vector.load %arg1[%c0_1, %c0_2, %c0_3] : memref<1x8x50xf32, #tpu.memory_space<vmem>>, vector<1x8x50xf32>
    %cst = arith.constant 7.07106781 : f32
    %3 = vector.broadcast %cst : f32 to vector<1x8x50xf32>
    %4 = arith.mulf %2, %3 : vector<1x8x50xf32>
    %5 = arith.addf %4, %1 : vector<1x8x50xf32>
    %c0_4 = arith.constant 0 : index
    %c0_5 = arith.constant 0 : index
    %c0_6 = arith.constant 0 : index
    %6 = vector.load %arg3[%c0_4, %c0_5, %c0_6] : memref<1x8x50xf32, #tpu.memory_space<vmem>>, vector<1x8x50xf32>
    tpu.vector_store %arg3[%c0_4, %c0_5, %c0_6], %5 {strides = array<i32>} : memref<1x8x50xf32, #tpu.memory_space<vmem>>, vector<1x8x50xf32>,
    return
  }
  func.func @transform_0(%arg0: i32) -> (i32, i32, i32) {
    %c0_i32 = arith.constant 0 : i32
    %c0_i32_0 = arith.constant 0 : i32
    %c0_i32_1 = arith.constant 0 : i32
    return %arg0, %c0_i32, %c0_i32_0 : i32, i32, i32
  }
  func.func @transform_1(%arg0: i32) -> (i32, i32) {
    %c0_i32 = arith.constant 0 : i32
    %c0_i32_0 = arith.constant 0 : i32
    %c0_i32_1 = arith.constant 0 : i32
    return %c0_i32, %c0_i32_0 : i32, i32
  }
  func.func @transform_2(%arg0: i32) -> (i32, i32, i32) {
    %c0_i32 = arith.constant 0 : i32
    %c0_i32_0 = arith.constant 0 : i32
    %c0_i32_1 = arith.constant 0 : i32
    return %arg0, %c0_i32, %c0_i32_0 : i32, i32, i32
  }
}

</mosaic_0001>

<llo_original>
// kernel: tpu_custom_call.1
$region0: #{tpu_custom_call.1}
  #allocation0 [shape = 'u32[]', space=smem, size = 0x4, offset = 0x4, fixed_abs, tag = 'smem constant byte address 0x4 - core index']
  #allocation1 [shape = 'u32[144,128]{1,0:T(1,128)}', space=vmem, size = 0x12000, scoped, tag = 'internal scratch']
  %s0 = inlined_call_operand.hbm [shape: f32[2,8,50], index: 0, kind: input, shape index: {}]
  %s1 = inlined_call_operand.hbm [shape: f32[8,50], index: 1, kind: input, shape index: {}]
  %s2 = inlined_call_operand.hbm [shape: f32[2,8,50], index: 2, kind: output, shape index: {}]
  %s3 = sld [smem:[#allocation0]]
  $region49: #{tpu_custom_call.1} parent=0
    _
  %s5 = ssub.s32 1, %s3
  %s6 = scalar_select 0, %s5, %s3
  $region1: #{tpu_custom_call.1} parent=0
    #allocation2 [shape = 'u8[8192]{0}', space=vmem, size = 0x2000, scoped, tag = 'input window, operand 0']
    #allocation3 [shape = 's32[2]{0}', space=sflag, size = 0x8, scoped, tag = 'scoped memory for tpu_custom_call.1']
    #allocation4 [shape = 's32[2]{0}', space=sflag, size = 0x8, scoped, tag = 'scoped memory for tpu_custom_call.1']
    #allocation5 [shape = 'u8[4096]{0}', space=vmem, size = 0x1000, scoped, tag = 'input window, operand 1, single buffered']
    #allocation6 [shape = 's32[1]{0}', space=sflag, size = 0x4, scoped, tag = 'scoped memory for tpu_custom_call.1']
    #allocation7 [shape = 'u8[8192]{0}', space=vmem, size = 0x2000, scoped, tag = 'output window, operand 0']
    %7 = vsyncpa [#allocation3], 0
    %s8 = scalar_lea.sflag [#allocation3], 1
    %9 = vsyncpa %s8, 0
    %10 = vsyncpa [#allocation6], 0
    %11 = vsyncpa [#allocation4], 0
    %s12 = scalar_lea.sflag [#allocation4], 1
    %13 = vsyncpa %s12, 0
    loop: start=0, step=1, limit=4
    $region2: #{tpu_custom_call.1} parent=1 // loop_pre_header
      _
    $region3: #{tpu_custom_call.1} parent=1 // loop_header
      %s15 = sphi 0, %s19
      %p16 = scmp.ge.s32.totalorder %s15, 4
      %s25 = sphi 0, %s27
      %s28 = sphi 0, %s25
      %s29 = sphi 0, %s28
      %s45 = sphi 0, %s29
      %s49 = sphi 0, %s49
      %s51 = sphi 0, %s49
      %s52 = sphi 0, %s51
      %s66 = sphi 0, %s52
      %s72 = sphi 0, %s74
      %s75 = sphi 0, %s72
      %s76 = sphi 0, %s75
      %s92 = sphi 0, %s76
    $region4: #{tpu_custom_call.1} parent=1 // loop_header_branch
      %18 = sbr.rel (%p16) target = $region8
    $region5: #{tpu_custom_call.1} parent=1 // loop_body
      %s20 = ssub.s32 %s15, 1
      %s21 = ssub.s32 %s15, 2
      %s22 = sadd.s32 %s15, 1
      %s23 = ssub.s32 %s15, %s22
      %p24 = scmp.eq.s32.totalorder %s23, 0
      %s26 = sadd.s32 %s25, 1
      %s27 = scalar_select %p24, %s25, %s26
      %p30 = pneg %p24
      %p31 = scmp.eq.s32.totalorder %s15, 1
      %p32 = por %p30, %p31
      %p33 = scmp.ne.s32.totalorder %s25, %s28
      %p34 = scmp.eq.s32.totalorder %s15, 0
      %p35 = por %p33, %p34
      %p36 = scmp.ne.s32.totalorder %s25, %s28
      %p37 = scmp.eq.s32.totalorder %s20, 1
      %p38 = por %p36, %p37
      %p39 = scmp.ne.s32.totalorder %s28, %s29
      %p40 = scmp.eq.s32.totalorder %s20, 0
      %p41 = por %p39, %p40
      %p42 = scmp.ne.s32.totalorder %s28, %s29
      %p43 = scmp.eq.s32.totalorder %s21, 1
      %p44 = por %p42, %p43
      %p46 = scmp.ne.s32.totalorder %s29, %s45
      %p47 = scmp.eq.s32.totalorder %s21, 0
      %p48 = por %p46, %p47
      %s50 = sadd.s32 %s49, 1
      %p53 = scmp.eq.s32.totalorder %s15, 1
      %p54 = scmp.ne.s32.totalorder %s49, %s51
      %p55 = scmp.eq.s32.totalorder %s15, 0
      %p56 = por %p54, %p55
      %p57 = scmp.ne.s32.totalorder %s49, %s51
      %p58 = scmp.eq.s32.totalorder %s20, 1
      %p59 = por %p57, %p58
      %p60 = scmp.ne.s32.totalorder %s51, %s52
      %p61 = scmp.eq.s32.totalorder %s20, 0
      %p62 = por %p60, %p61
      %p63 = scmp.ne.s32.totalorder %s51, %s52
      %p64 = scmp.eq.s32.totalorder %s21, 1
      %p65 = por %p63, %p64
      %p67 = scmp.ne.s32.totalorder %s52, %s66
      %p68 = scmp.eq.s32.totalorder %s21, 0
      %p69 = por %p67, %p68
      %s70 = ssub.s32 %s15, %s22
      %p71 = scmp.eq.s32.totalorder %s70, 0
      %s73 = sadd.s32 %s72, 1
      %s74 = scalar_select %p71, %s72, %s73
      %p77 = pneg %p71
      %p78 = scmp.eq.s32.totalorder %s15, 1
      %p79 = por %p77, %p78
      %p80 = scmp.ne.s32.totalorder %s72, %s75
      %p81 = scmp.eq.s32.totalorder %s15, 0
      %p82 = por %p80, %p81
      %p83 = scmp.ne.s32.totalorder %s72, %s75
      %p84 = scmp.eq.s32.totalorder %s20, 1
      %p85 = por %p83, %p84
      %p86 = scmp.ne.s32.totalorder %s75, %s76
      %p87 = scmp.eq.s32.totalorder %s20, 0
      %p88 = por %p86, %p87
      %p89 = scmp.ne.s32.totalorder %s75, %s76
      %p90 = scmp.eq.s32.totalorder %s21, 1
      %p91 = por %p89, %p90
      %p93 = scmp.ne.s32.totalorder %s76, %s92
      %p94 = scmp.eq.s32.totalorder %s21, 0
      %p95 = por %p93, %p94
      %p96 = scmp.le.s32.totalorder 1, %s15
      %p97 = scmp.lt.s32.totalorder %s15, 3
      %p98 = pnand %p96, %p97
      %p99 = pneg %p98
      // Predicated region
      $region9: #{tpu_custom_call.1} parent=5 // pred_check
        _
      $region10: #{tpu_custom_call.1} parent=5 // pred_check_branch
        %101 = sbr.rel (%p98) target = $region12
      $region11: #{tpu_custom_call.1} parent=5 // pred_region
        %s102 = ssub.s32 %s15, 1
        // Predicated region
        $region13: #{tpu_custom_call.1} parent=11 // pred_check
          %p103 = pneg %p62
        $region14: #{tpu_custom_call.1} parent=11 // pred_check_branch
          %105 = sbr.rel (%p103) target = $region16
        $region15: #{tpu_custom_call.1} parent=11 // pred_region
          %s107 = ssub.s32 128, 128
          %108 = vsyncadd [#allocation6], %s107
          %s110 = sshll.u32 [#allocation5], 4
          %s111 = int_to_ptr.vmem [resolvable:$true] %s110
          %113 = dma.hbm_to_vmem [thread:$0]  %s1, 128, %s111, [#allocation6]
        $region16: #{tpu_custom_call.1} parent=11 // pred_fallthru
          _
      $region12: #{tpu_custom_call.1} parent=5 // pred_fallthru
        _
      %p114 = scmp.lt.s32.totalorder %s15, 2
      // Predicated region
      $region17: #{tpu_custom_call.1} parent=5 // pred_check
        %p115 = pneg %p114
      $region18: #{tpu_custom_call.1} parent=5 // pred_check_branch
        %117 = sbr.rel (%p115) target = $region20
      $region19: #{tpu_custom_call.1} parent=5 // pred_region
        // Predicated region
        $region21: #{tpu_custom_call.1} parent=19 // pred_check
          %p118 = pneg %p35
        $region22: #{tpu_custom_call.1} parent=19 // pred_check_branch
          %120 = sbr.rel (%p118) target = $region24
        $region23: #{tpu_custom_call.1} parent=19 // pred_region
          %s121 = sand.u32 %s25, 1
          %s122 = scalar_lea.sflag [#allocation3], %s121
          %s123 = sand.u32 %s25, 1
          %s124 = smul.addr %s123, 8
          %s125 = scalar_lea.vmem [#allocation2], %s124
          %s127 = ssub.s32 128, 128
          %128 = vsyncadd %s122, %s127
          %s129 = smul.addr %s15, 128
          %s130 = scalar_lea.hbm %s0, %s129
          %s132 = sshll.u32 %s125, 4
          %s133 = int_to_ptr.vmem [resolvable:$true] %s132
          %135 = dma.hbm_to_vmem [thread:$0]  %s130, 128, %s133, %s122
        $region24: #{tpu_custom_call.1} parent=19 // pred_fallthru
          _
      $region20: #{tpu_custom_call.1} parent=5 // pred_fallthru
        _
      %p136 = scmp.le.s32.totalorder 1, %s15
      %p137 = scmp.lt.s32.totalorder %s15, 3
      %p138 = pnand %p136, %p137
      %p139 = pneg %p138
      // Predicated region
      $region25: #{tpu_custom_call.1} parent=5 // pred_check
        _
      $region26: #{tpu_custom_call.1} parent=5 // pred_check_branch
        %141 = sbr.rel (%p138) target = $region28
      $region27: #{tpu_custom_call.1} parent=5 // pred_region
        %s142 = ssub.s32 %s15, 1
        %s143 = sand.u32 %s28, 1
        %s144 = scalar_lea.sflag [#allocation3], %s143
        %s145 = sand.u32 %s28, 1
        %s146 = smul.addr %s145, 8
        %s147 = scalar_lea.vmem [#allocation2], %s146
        // Predicated region
        $region29: #{tpu_custom_call.1} parent=27 // pred_check
          %p148 = pneg %p41
        $region30: #{tpu_custom_call.1} parent=27 // pred_check_branch
          %150 = sbr.rel (%p148) target = $region32
        $region31: #{tpu_custom_call.1} parent=27 // pred_region
          %151 = dma.done %s144, 128
        $region32: #{tpu_custom_call.1} parent=27 // pred_fallthru
          _
        // Predicated region
        $region33: #{tpu_custom_call.1} parent=27 // pred_check
          %p152 = pneg %p62
        $region34: #{tpu_custom_call.1} parent=27 // pred_check_branch
          %154 = sbr.rel (%p152) target = $region36
        $region35: #{tpu_custom_call.1} parent=27 // pred_region
          %155 = dma.done [#allocation6], 128
        $region36: #{tpu_custom_call.1} parent=27 // pred_fallthru
          _
        %s156 = sand.u32 %s28, 1
        %s157 = scalar_lea.sflag [#allocation3], %s156
        %s158 = sand.u32 %s28, 1
        %s159 = smul.addr %s158, 8
        %s160 = scalar_lea.vmem [#allocation2], %s159
        %p161 = pneg %p41
        %p162 = pneg %p38
        %p163 = pneg %p62
        %p164 = pneg %p59
        %p165 = pneg %p88
        %p166 = pneg %p85
        %s167 = sand.u32 %s75, 1
        %s168 = scalar_lea.sflag [#allocation4], %s167
        %s169 = sand.u32 %s75, 1
        %s170 = smul.addr %s169, 8
        %s171 = scalar_lea.vmem [#allocation7], %s170
        %v172 = vld [vmem:[#allocation5] sm:$0xff]
        %v173 = vld [vmem:[%s147] sm:$0xff]
        %v174 = vmul.f32 %v173, 7.071068
        %v175 = vadd.f32 %v174, %v172
        %vm176 = vcmask 408576
        %177 = vst.msk [vmem:[%s171] sm:$0xff] %vm176, %v175
        %s178 = sand.u32 %s75, 1
        %s179 = scalar_lea.sflag [#allocation4], %s178
        %s180 = sand.u32 %s75, 1
        %s181 = smul.addr %s180, 8
        %s182 = scalar_lea.vmem [#allocation7], %s181
        // Predicated region
        $region37: #{tpu_custom_call.1} parent=27 // pred_check
          %p183 = pneg %p85
        $region38: #{tpu_custom_call.1} parent=27 // pred_check_branch
          %185 = sbr.rel (%p183) target = $region40
        $region39: #{tpu_custom_call.1} parent=27 // pred_region
          %s187 = ssub.s32 128, 128
          %188 = vsyncadd %s179, %s187
          %s189 = smul.addr %s20, 128
          %s190 = scalar_lea.hbm %s2, %s189
          %s192 = sshll.u32 %s182, 4
          %s193 = int_to_ptr.vmem [resolvable:$true] %s192
          %195 = dma.vmem_to_hbm [thread:$0]  %s193, 128, %s190, %s179
        $region40: #{tpu_custom_call.1} parent=27 // pred_fallthru
          _
      $region28: #{tpu_custom_call.1} parent=5 // pred_fallthru
        _
      %p196 = scmp.le.s32.totalorder 2, %s15
      // Predicated region
      $region41: #{tpu_custom_call.1} parent=5 // pred_check
        %p197 = pneg %p196
      $region42: #{tpu_custom_call.1} parent=5 // pred_check_branch
        %199 = sbr.rel (%p197) target = $region44
      $region43: #{tpu_custom_call.1} parent=5 // pred_region
        %s200 = ssub.s32 %s15, 2
        // Predicated region
        $region45: #{tpu_custom_call.1} parent=43 // pred_check
          %p201 = pneg %p91
        $region46: #{tpu_custom_call.1} parent=43 // pred_check_branch
          %203 = sbr.rel (%p201) target = $region48
        $region47: #{tpu_custom_call.1} parent=43 // pred_region
          %s204 = sand.u32 %s76, 1
          %s205 = scalar_lea.sflag [#allocation4], %s204
          %s206 = sand.u32 %s76, 1
          %s207 = smul.addr %s206, 8
          %s208 = scalar_lea.vmem [#allocation7], %s207
          %209 = dma.done %s205, 128
        $region48: #{tpu_custom_call.1} parent=43 // pred_fallthru
          _
      $region44: #{tpu_custom_call.1} parent=5 // pred_fallthru
        _
    $region6: #{tpu_custom_call.1} parent=1 // loop_footer
      %s19 = sadd.s32 1, %s15
    $region7: #{tpu_custom_call.1} parent=1 // loop_footer_branch
      %14 = sbr.rel target = $region3
    $region8: #{tpu_custom_call.1} parent=1 // loop_exit
      _
    %210 = vsyncpa [#allocation3], 1
    %s211 = scalar_lea.sflag [#allocation3], 1
    %212 = vsyncpa %s211, 1
    %213 = vsyncpa [#allocation6], 1
    %214 = vsyncpa [#allocation4], 1
    %s215 = scalar_lea.sflag [#allocation4], 1
    %216 = vsyncpa %s215, 1

</llo_original>
